<compile_context>
chip_gen: v7x
topology: tpu7x:2x2x1
jax: 0.10.0
libtpu: 0.0.40
codegen_flags: <defaults>
</compile_context>

<pallas_src>
import functools

import jax
import jax.numpy as jnp
from jax import lax
from jax.experimental import pallas as pl
from jax.experimental.pallas import tpu as pltpu


def _round_up(x, m):
    return (x + m - 1) // m * m


_DEFAULT_SCOPED_VMEM = 16 * 1024 * 1024  # v5e scoped default; v6e/v7x default 32 MiB.


def _maybe_vmem_limit(needed_bytes):
    """Return a vmem_limit_bytes override only when the default may be too small."""
    needed = int(needed_bytes * 1.25) + (2 << 20)
    if needed <= _DEFAULT_SCOPED_VMEM:
        return None
    try:
        cap = int(pltpu.get_tpu_info().vmem_capacity_bytes)
    except Exception:  # best-effort hardware query
        cap = 64 * 1024 * 1024  # v7x physical VMEM per TensorCore (smallest)
    return min(needed, int(cap * 9 // 10))


def _compiler_params(dimension_semantics, vmem_needed_bytes):
    kwargs = dict(dimension_semantics=dimension_semantics)
    limit = _maybe_vmem_limit(vmem_needed_bytes)
    if limit is not None:
        kwargs["vmem_limit_bytes"] = limit
    return pltpu.CompilerParams(**kwargs)


def _apply_nonlin(pre, nonlin):
    """Epilogue nonlinearity, applied in float32 (trace-time dispatch)."""
    if nonlin == "tanh":
        return jnp.tanh(pre)
    if nonlin == "relu":
        return jnp.maximum(pre, 0.0)
    if nonlin == "sigmoid":
        return jax.nn.sigmoid(pre)
    if nonlin is None:
        return pre
    if nonlin == "modrelu":
        # TODO(synk): 'modrelu' (learned-bias mod-ReLU) not implemented.
        raise NotImplementedError("modrelu nonlinearity is not implemented")
    raise ValueError(f"unknown nonlinearity: {nonlin!r}")


def _pad2(a, rows, cols, dtype):
    r, c = a.shape
    if r == rows and c == cols and a.dtype == jnp.dtype(dtype):
        return a  # already aligned: skip the extra HBM pass
    return jnp.zeros((rows, cols), dtype).at[:r, :c].set(a.astype(dtype))


def _pad3(a, d0, d1, d2, dtype):
    s0, s1, s2 = a.shape
    if (s0, s1, s2) == (d0, d1, d2) and a.dtype == jnp.dtype(dtype):
        return a
    return jnp.zeros((d0, d1, d2), dtype).at[:s0, :s1, :s2].set(a.astype(dtype))


# -----------------------------------------------------------------------------
# One-time parameter layout prep (hoisted out of the per-call wrappers).
# -----------------------------------------------------------------------------
def prepare_params(params):
    """Pre-transpose / cast / pad weights once into an MXU-friendly layout."""
    U_w = jnp.asarray(params["U_w"], jnp.float32)   # (hid, inp)
    V_w = jnp.asarray(params["V_w"], jnp.float32)   # (hid, hid)
    hid, inp = U_w.shape
    U_b = params.get("U_b")
    U_b = jnp.zeros((hid,), jnp.float32) if U_b is None else jnp.asarray(U_b, jnp.float32)

    Kx_p = _round_up(inp, 128)
    N_p = _round_up(hid, 128)
    K_p = _round_up(inp + hid, 128)

    wx_p = _pad2(U_w.T, Kx_p, N_p, jnp.bfloat16)                       # (Kx_p, N_p)
    wh_p = _pad2(V_w.T, N_p, N_p, jnp.bfloat16)                        # (N_p, N_p)
    w_fused_p = _pad2(jnp.concatenate([U_w.T, V_w.T], axis=0),          # [U.T ; V.T]
                      K_p, N_p, jnp.bfloat16)
    b_p = jnp.zeros((1, N_p), jnp.float32).at[0, :hid].set(U_b)

    return {
        "inp": inp, "hid": hid, "Kx_p": Kx_p, "N_p": N_p, "K_p": K_p,
        "wx_p": wx_p, "wh_p": wh_p, "w_fused_p": w_fused_p, "b_p": b_p,
    }


# -----------------------------------------------------------------------------
# Generic fused linear kernel:  out = nonlin(x @ w + b)
# -----------------------------------------------------------------------------
def _linear_kernel(x_ref, w_ref, b_ref, out_ref, *, nonlin):
    acc = jnp.dot(x_ref[...], w_ref[...], preferred_element_type=jnp.float32)
    out_ref[...] = _apply_nonlin(acc + b_ref[...], nonlin).astype(out_ref.dtype)


def _pallas_linear(x_p, w_p, b_p, *, nonlin, out_dtype):
    """out = nonlin(x_p @ w_p + b_p); shapes already 8/128-aligned."""
    M, K = x_p.shape
    K2, N = w_p.shape
    assert K == K2
    # TODO(synk): add a K-tiled variant ("arbitrary" grid axis + f32 accumulator
    # scratch) for very large K (inp + hid >~ 4-8k) where the K strip overflows VMEM.
    TM = 256 if M % 256 == 0 else (128 if M % 128 == 0 else M)
    TN = 256 if N % 256 == 0 else 128  # prefer 256-wide output tiles (v6e/v7x MXU)

    out_bytes = jnp.dtype(out_dtype).itemsize
    vmem_needed = 2 * (TM * K * 2 + K * TN * 2 + TN * 4 + TM * TN * out_bytes)
    n_transc = M * N if nonlin in ("tanh", "sigmoid") else 0

    # Grid: weights on the SLOW axis so the (K, TN) weight strip is DMA'd once
    # per output-column strip instead of once per batch tile.
    return pl.pallas_call(
        functools.partial(_linear_kernel, nonlin=nonlin),
        out_shape=jax.ShapeDtypeStruct((M, N), out_dtype),
        grid=(N // TN, M // TM),
        in_specs=[
            pl.BlockSpec((TM, K), lambda j, i: (i, 0)),   # activations
            pl.BlockSpec((K, TN), lambda j, i: (0, j)),   # weights (slow axis)
            pl.BlockSpec((1, TN), lambda j, i: (0, j)),   # bias
        ],
        out_specs=pl.BlockSpec((TM, TN), lambda j, i: (i, j)),
        compiler_params=_compiler_params(("parallel", "parallel"), vmem_needed),
        cost_estimate=pl.CostEstimate(
            flops=2 * M * K * N,
            transcendentals=n_transc,
            bytes_accessed=M * K * 2 + K * N * 2 + N * 4 + M * N * out_bytes),
    )(x_p, w_p, b_p)


# -----------------------------------------------------------------------------
# Single-step forward (matches RNN.forward): h = nonlin(U(x) + V(hidden))
# -----------------------------------------------------------------------------
def rnn_forward(x, hidden, prepared, *, nonlin="tanh", reset=False,
                out_dtype=jnp.float32):
    B, inp = x.shape
    hid = prepared["hid"]
    assert inp == prepared["inp"]
    if hidden is None or reset:
        hidden = jnp.zeros((B, hid), x.dtype)

    K_p, N_p = prepared["K_p"], prepared["N_p"]
    B_p = _round_up(B, 8)

    # Fused GEMM:  h = nonlin([x, hidden] @ [U_w.T ; V_w.T] + U_b)
    xh = jnp.concatenate([x, hidden.astype(x.dtype)], axis=1)  # (B, inp+hid)
    xh_p = _pad2(xh, B_p, K_p, jnp.bfloat16)

    h_p = _pallas_linear(xh_p, prepared["w_fused_p"], prepared["b_p"],
                         nonlin=nonlin, out_dtype=out_dtype)
    h = h_p[:B, :hid]
    # Match the PyTorch return signature: (h, (None, None), None)
    return h, (None, None), None


# -----------------------------------------------------------------------------
# Multi-step recurrence: chunked time grid, VMEM-resident V_w, bf16 carry.
# -----------------------------------------------------------------------------
def _choose_batch_tiling(B):
    """Pad batch to 8 and pick a batch tile; >=2 tiles when B allows so the
    'parallel' batch grid axis can be split across v7x's two TensorCores."""
    B_p = _round_up(B, 8)
    if B_p < 16:
        return B_p, B_p
    tb = _round_up((B_p + 1) // 2, 8)
    return _round_up(B_p, tb), tb


def _rnn_seq_kernel(xproj_ref, wh_ref, h0_ref, hs_ref, h_carry, *, nonlin,
                    t_chunk):
    tc = pl.program_id(1)  # time-chunk axis (fastest varying, "arbitrary")

    @pl.when(tc == 0)
    def _():
        # bf16 carry: the MXU consumes bf16 anyway, so this drops the per-step
        # f32->bf16 cast from the serial critical path.
        h_carry[...] = h0_ref[...].astype(h_carry.dtype)

    def step(t, carry):
        pre = xproj_ref[t] + jnp.dot(h_carry[...], wh_ref[...],
                                     preferred_element_type=jnp.float32)
        h_new = _apply_nonlin(pre, nonlin)       # f32 epilogue
        h_carry[...] = h_new.astype(h_carry.dtype)
        hs_ref[t] = h_new.astype(hs_ref.dtype)
        return carry

    lax.fori_loop(0, t_chunk, step, 0, unroll=True)


def rnn_sequence_forward(xs, hidden, prepared, *, nonlin="tanh", t_chunk=None,
                         out_dtype=jnp.float32):
    """Runs T RNN steps:  hs[t] = nonlin(U(xs[t]) + V(hs[t-1])).

    1) xproj = xs @ U_w.T + b for ALL T as one big GEMM (M = T*B, no serial
       dependency, fills the MXU).
    2) One pallas_call runs the recurrence: T_CHUNK steps per grid iteration,
       V_w VMEM-resident (constant block index), bf16 hidden carry scratch,
       batch tiles on an outer 'parallel' axis.
    """
    T, B, inp = xs.shape
    hid = prepared["hid"]
    assert inp == prepared["inp"]
    if hidden is None:
        hidden = jnp.zeros((B, hid), jnp.float32)

    Kx_p, N_p = prepared["Kx_p"], prepared["N_p"]
    B_p, TB = _choose_batch_tiling(B)
    if t_chunk is None:
        t_chunk = min(T, 8)
    T_p = _round_up(T, t_chunk)

    xs_p = _pad3(xs, T_p, B_p, Kx_p, jnp.bfloat16)
    h0_p = _pad2(hidden, B_p, N_p, jnp.float32)

    # ---- 1) batched input projection (+bias): one MXU-friendly GEMM ----
    xproj = _pallas_linear(xs_p.reshape(T_p * B_p, Kx_p), prepared["wx_p"],
                           prepared["b_p"], nonlin=None, out_dtype=jnp.float32)
    xproj = xproj.reshape(T_p, B_p, N_p)

    # ---- 2) serial recurrence, chunked over time ----
    out_bytes = jnp.dtype(out_dtype).itemsize
    n_transc = T_p * B_p * N_p if nonlin in ("tanh", "sigmoid") else 0
    vmem_needed = (2 * t_chunk * TB * N_p * 4          # xproj blocks (dbl-buffered)
                   + 2 * N_p * N_p * 2                 # resident V_w (bf16)
                   + 2 * TB * N_p * 4                  # h0 block
                   + 2 * t_chunk * TB * N_p * out_bytes  # hs blocks
                   + TB * N_p * 2)                     # bf16 hidden carry scratch
    # TODO(synk): for hid >~ 3.5-4k (v7x's 64 MiB VMEM) add an N-tile grid axis
    # that streams V_w column blocks instead of keeping all of V_w resident.

    hs_p = pl.pallas_call(
        functools.partial(_rnn_seq_kernel, nonlin=nonlin, t_chunk=t_chunk),
        out_shape=jax.ShapeDtypeStruct((T_p, B_p, N_p), out_dtype),
        grid=(B_p // TB, T_p // t_chunk),
        in_specs=[
            pl.BlockSpec((t_chunk, TB, N_p), lambda b, t: (t, b, 0)),  # xproj
            pl.BlockSpec((N_p, N_p), lambda b, t: (0, 0)),             # V_w (resident)
            pl.BlockSpec((TB, N_p), lambda b, t: (b, 0)),              # h0
        ],
        out_specs=pl.BlockSpec((t_chunk, TB, N_p), lambda b, t: (t, b, 0)),
        scratch_shapes=[pltpu.VMEM((TB, N_p), jnp.bfloat16)],          # hidden carry
        compiler_params=_compiler_params(("parallel", "arbitrary"), vmem_needed),
        cost_estimate=pl.CostEstimate(
            flops=2 * T_p * B_p * N_p * N_p,
            transcendentals=n_transc,
            bytes_accessed=(T_p * B_p * N_p * 4 + N_p * N_p * 2
                            + B_p * N_p * 4 + T_p * B_p * N_p * out_bytes)),
    )(xproj, prepared["wh_p"], h0_p)

    return hs_p[:T, :B, :hid]


def init_params(key, inp_size, hid_size):
    """Deterministic parameter init (xavier-normal-like for U, V)."""
    k1, k2, k3 = jax.random.split(key, 3)
    u_std = (2.0 / (inp_size + hid_size)) ** 0.5
    v_std = (2.0 / (hid_size + hid_size)) ** 0.5
    return {
        "U_w": u_std * jax.random.normal(k1, (hid_size, inp_size), jnp.float32),
        "U_b": 0.01 * jax.random.normal(k2, (hid_size,), jnp.float32),
        "V_w": v_std * jax.random.normal(k3, (hid_size, hid_size), jnp.float32),
    }


if __name__ == "__main__":
    key = jax.random.PRNGKey(0)
    batch, inp_size, hid_size, seq_len = 8, 16, 32, 8

    kx, kh, kp, ks = jax.random.split(key, 4)
    x = jax.random.normal(kx, (batch, inp_size), jnp.float32)
    hidden = jax.random.normal(kh, (batch, hid_size), jnp.float32)
    params = init_params(kp, inp_size, hid_size)
    xs = jax.random.normal(ks, (seq_len, batch, inp_size), jnp.float32)

    prepared = prepare_params(params)  # one-time layout prep (cache & reuse)

    # --- single step (RNN.forward), with and without an initial hidden ---
    h, _, _ = rnn_forward(x, hidden, prepared, nonlin="tanh")
    h = jax.block_until_ready(h)
    h0, _, _ = rnn_forward(x, None, prepared, nonlin="tanh")
    h0 = jax.block_until_ready(h0)

    ref = jnp.tanh(x @ params["U_w"].T + params["U_b"] + hidden @ params["V_w"].T)
    ref0 = jnp.tanh(x @ params["U_w"].T + params["U_b"])
    assert h.shape == (batch, hid_size) and h0.shape == (batch, hid_size)
    # Tolerance loosened for bf16 MXU inputs (f32 accumulation).
    assert jnp.allclose(h, ref, atol=2e-2), "single-step mismatch vs reference"
    assert jnp.allclose(h0, ref0, atol=2e-2), "single-step (hidden=None) mismatch"

    # --- multi-step recurrence (precomputed x-projection + chunked time grid) ---
    hs = rnn_sequence_forward(xs, hidden, prepared, nonlin="tanh")
    hs = jax.block_until_ready(hs)

    def scan_ref(h_c, x_t):
        h_new = jnp.tanh(x_t @ params["U_w"].T + params["U_b"]
                         + h_c @ params["V_w"].T)
        return h_new, h_new

    _, hs_ref = jax.lax.scan(scan_ref, hidden, xs)
    assert hs.shape == (seq_len, batch, hid_size)
    assert jnp.allclose(hs, hs_ref, atol=5e-2), "sequence mismatch vs reference"

    print("KERNEL_OK")
</pallas_src>

<mosaic_0001>
module attributes {stable_mosaic.version = 11 : i64} {
  func.func @_linear_kernel(%arg0: i32, %arg1: i32, %arg2: memref<8x128xbf16, #tpu.memory_space<vmem>>, %arg3: memref<128x128xbf16, #tpu.memory_space<vmem>>, %arg4: memref<1x128xf32, #tpu.memory_space<vmem>>, %arg5: memref<8x128xf32, #tpu.memory_space<vmem>>) attributes {dimension_semantics = [#tpu.dimension_semantics<parallel>, #tpu.dimension_semantics<parallel>], iteration_bounds = array<i64: 1, 1>, scalar_prefetch = 0 : i64, scratch_operands = 0 : i64, tpu.core_type = #tpu.core_type<tc>, window_params = [{transform_indices = @transform_0, window_bounds = array<i64: 8, 128>}, {transform_indices = @transform_1, window_bounds = array<i64: 128, 128>}, {transform_indices = @transform_2, window_bounds = array<i64: 1, 128>}, {transform_indices = @transform_3, window_bounds = array<i64: 8, 128>}]} {
    %c0 = arith.constant 0 : index
    %c0_0 = arith.constant 0 : index
    %0 = vector.load %arg2[%c0, %c0_0] : memref<8x128xbf16, #tpu.memory_space<vmem>>, vector<8x128xbf16>
    %c0_1 = arith.constant 0 : index
    %c0_2 = arith.constant 0 : index
    %1 = vector.load %arg3[%c0_1, %c0_2] : memref<128x128xbf16, #tpu.memory_space<vmem>>, vector<128x128xbf16>
    %cst = arith.constant dense<0.000000e+00> : vector<8x128xf32>
    %2 = tpu.matmul %0, %1, %cst {dimension_numbers = #tpu.dot_dimension_numbers<[1], [0], [0], [1], [0, 0, 1, 1], [], []>} : vector<8x128xbf16>, vector<128x128xbf16>, vector<8x128xf32> -> vector<8x128xf32>
    %c0_3 = arith.constant 0 : index
    %c0_4 = arith.constant 0 : index
    %3 = vector.load %arg4[%c0_3, %c0_4] : memref<1x128xf32, #tpu.memory_space<vmem>>, vector<1x128xf32>
    %4 = vector.broadcast %3 : vector<1x128xf32> to vector<8x128xf32>
    %5 = arith.addf %2, %4 : vector<8x128xf32>
    %6 = math.tanh %5 : vector<8x128xf32>
    %c0_5 = arith.constant 0 : index
    %c0_6 = arith.constant 0 : index
    %7 = vector.load %arg5[%c0_5, %c0_6] : memref<8x128xf32, #tpu.memory_space<vmem>>, vector<8x128xf32>
    tpu.vector_store %arg5[%c0_5, %c0_6], %6 {strides = array<i32>} : memref<8x128xf32, #tpu.memory_space<vmem>>, vector<8x128xf32>,
    return
  }
  func.func @transform_0(%arg0: i32, %arg1: i32) -> (i32, i32) {
    %c0_i32 = arith.constant 0 : i32
    %c0_i32_0 = arith.constant 0 : i32
    return %arg1, %c0_i32 : i32, i32
  }
  func.func @transform_1(%arg0: i32, %arg1: i32) -> (i32, i32) {
    %c0_i32 = arith.constant 0 : i32
    %c0_i32_0 = arith.constant 0 : i32
    return %c0_i32, %arg0 : i32, i32
  }
  func.func @transform_2(%arg0: i32, %arg1: i32) -> (i32, i32) {
    %c0_i32 = arith.constant 0 : i32
    %c0_i32_0 = arith.constant 0 : i32
    return %c0_i32, %arg0 : i32, i32
  }
  func.func @transform_3(%arg0: i32, %arg1: i32) -> (i32, i32) {
    %c0_i32 = arith.constant 0 : i32
    return %arg1, %arg0 : i32, i32
  }
}

</mosaic_0001>

<llo_original>
// kernel: tpu_custom_call.1
$region0: #{tpu_custom_call.1}
  #allocation0 [shape = 'u32[]', space=smem, size = 0x4, offset = 0x4, fixed_abs, tag = 'smem constant byte address 0x4 - core index']
  #allocation1 [shape = 'u32[144,128]{1,0:T(1,128)}', space=vmem, size = 0x12000, scoped, tag = 'internal scratch']
  %s0 = inlined_call_operand.hbm [shape: bf16[8,128], index: 0, kind: input, shape index: {}]
  %s1 = inlined_call_operand.hbm [shape: bf16[128,128], index: 1, kind: input, shape index: {}]
  %s2 = inlined_call_operand.vmem [shape: f32[1,128], index: 2, kind: input, shape index: {}]
  %s3 = inlined_call_operand.hbm [shape: f32[8,128], index: 3, kind: output, shape index: {}]
  %s4 = sld [smem:[#allocation0]]
  $region30: #{tpu_custom_call.1} parent=0
    _
  %s6 = ssub.s32 1, %s4
  %s7 = scalar_select 0, %s6, %s4
  $region1: #{tpu_custom_call.1} parent=0
    #allocation2 [shape = 'u8[2048]{0}', space=vmem, size = 0x800, scoped, tag = 'input window, operand 0, single buffered']
    #allocation3 [shape = 's32[1]{0}', space=sflag, size = 0x4, scoped, tag = 'scoped memory for tpu_custom_call.1']
    #allocation4 [shape = 's32[1]{0}', space=sflag, size = 0x4, scoped, tag = 'scoped memory for tpu_custom_call.1']
    #allocation5 [shape = 'u8[32768]{0}', space=vmem, size = 0x8000, scoped, tag = 'input window, operand 1, single buffered']
    #allocation6 [shape = 's32[1]{0}', space=sflag, size = 0x4, scoped, tag = 'scoped memory for tpu_custom_call.1']
    #allocation7 [shape = 'u8[4096]{0}', space=vmem, size = 0x1000, scoped, tag = 'output window, operand 0, single buffered']
    %8 = vsyncpa [#allocation3], 0
    %9 = vsyncpa [#allocation6], 0
    %10 = vsyncpa [#allocation4], 0
    // Predicated region
    $region2: #{tpu_custom_call.1} parent=1 // pred_check
      _
    $region3: #{tpu_custom_call.1} parent=1 // pred_check_branch
      %12 = sbr.rel (0) target = $region5
    $region4: #{tpu_custom_call.1} parent=1 // pred_region
      %s14 = ssub.s32 64, 64
      %15 = vsyncadd [#allocation3], %s14
      %s17 = sshll.u32 [#allocation2], 4
      %s18 = int_to_ptr.vmem [resolvable:$true] %s17
      %20 = dma.hbm_to_vmem [thread:$0]  %s0, 64, %s18, [#allocation3]
    $region5: #{tpu_custom_call.1} parent=1 // pred_fallthru
      _
    // Predicated region
    $region6: #{tpu_custom_call.1} parent=1 // pred_check
      _
    $region7: #{tpu_custom_call.1} parent=1 // pred_check_branch
      %22 = sbr.rel (0) target = $region9
    $region8: #{tpu_custom_call.1} parent=1 // pred_region
      %s24 = ssub.s32 1024, 1024
      %25 = vsyncadd [#allocation6], %s24
      %s26 = sshll.u32 [#allocation5], 4
      %s27 = int_to_ptr.vmem [resolvable:$true] %s26
      %32 = dma.hbm_to_vmem [thread:$0]  %s1, 1024, %s27, [#allocation6], 64, 64, 4
    $region9: #{tpu_custom_call.1} parent=1 // pred_fallthru
      _
    // Predicated region
    $region10: #{tpu_custom_call.1} parent=1 // pred_check
      _
    $region11: #{tpu_custom_call.1} parent=1 // pred_check_branch
      %34 = sbr.rel (0) target = $region13
    $region12: #{tpu_custom_call.1} parent=1 // pred_region
      _
    $region13: #{tpu_custom_call.1} parent=1 // pred_fallthru
      _
    // Predicated region
    $region14: #{tpu_custom_call.1} parent=1 // pred_check
      _
    $region15: #{tpu_custom_call.1} parent=1 // pred_check_branch
      %36 = sbr.rel (0) target = $region17
    $region16: #{tpu_custom_call.1} parent=1 // pred_region
      %37 = dma.done [#allocation3], 64
    $region17: #{tpu_custom_call.1} parent=1 // pred_fallthru
      _
    // Predicated region
    $region18: #{tpu_custom_call.1} parent=1 // pred_check
      _
    $region19: #{tpu_custom_call.1} parent=1 // pred_check_branch
      %39 = sbr.rel (0) target = $region21
    $region20: #{tpu_custom_call.1} parent=1 // pred_region
      %40 = dma.done [#allocation6], 1024
    $region21: #{tpu_custom_call.1} parent=1 // pred_fallthru
      _
    %v42 = vld [vmem:[#allocation2] sm:$0xf]
    %v43 = vld [vmem:[#allocation5] sm:$0xf]
    %v44 = vld [vmem:[#allocation5 + $0x4] sm:$0xf]
    %v45 = vld [vmem:[#allocation5 + $0x8] sm:$0xf]
    %v46 = vld [vmem:[#allocation5 + $0xc] sm:$0xf]
    %v47 = vld [vmem:[#allocation5 + $0x10] sm:$0xf]
    %v48 = vld [vmem:[#allocation5 + $0x14] sm:$0xf]
    %v49 = vld [vmem:[#allocation5 + $0x18] sm:$0xf]
    %v50 = vld [vmem:[#allocation5 + $0x1c] sm:$0xf]
    %v51 = vld [vmem:[#allocation5 + $0x20] sm:$0xf]
    %v52 = vld [vmem:[#allocation5 + $0x24] sm:$0xf]
    %v53 = vld [vmem:[#allocation5 + $0x28] sm:$0xf]
    %v54 = vld [vmem:[#allocation5 + $0x2c] sm:$0xf]
    %v55 = vld [vmem:[#allocation5 + $0x30] sm:$0xf]
    %v56 = vld [vmem:[#allocation5 + $0x34] sm:$0xf]
    %v57 = vld [vmem:[#allocation5 + $0x38] sm:$0xf]
    %v58 = vld [vmem:[#allocation5 + $0x3c] sm:$0xf]
    %v59 = vld [vmem:[%s2] sm:$0x1]
    %v61 = vlaneseq
    %v62 = vshrl.u32 %v61, 7
    %v63 = vsub.s32 0, %v62
    %v64 = vrot.slane %v59, %v63
    %v82 = vunpack.c.l.b16 %v43
    %v83 = vunpack.c.l.b16 %v44
    %v84 = vunpack.c.l.b16 %v45
    %v85 = vunpack.c.l.b16 %v46
    %v86 = vunpack.c.l.b16 %v47
    %v87 = vunpack.c.l.b16 %v48
    %v88 = vunpack.c.l.b16 %v49
    %v89 = vunpack.c.l.b16 %v50
    %v90 = vunpack.c.l.b16 %v51
    %v91 = vunpack.c.l.b16 %v52
    %v92 = vunpack.c.l.b16 %v53
    %v93 = vunpack.c.l.b16 %v54
    %v94 = vunpack.c.l.b16 %v55
    %v95 = vunpack.c.l.b16 %v56
    %v96 = vunpack.c.l.b16 %v57
    %v97 = vunpack.c.l.b16 %v58
    %v98 = vpack.c.b16 %v83, %v82
    %v99 = vpack.c.b16 %v85, %v84
    %v100 = vpack.c.b16 %v87, %v86
    %v101 = vpack.c.b16 %v89, %v88
    %v102 = vpack.c.b16 %v91, %v90
    %v103 = vpack.c.b16 %v93, %v92
    %v104 = vpack.c.b16 %v95, %v94
    %v105 = vpack.c.b16 %v97, %v96
    %114 = vmatprep.subr.bf16.mxu0 0
    %115 = vmatpush1.bf16.msra.mxu0 %v98
    %116 = vmatprep.subr.bf16.mxu0 0
    %117 = vmatpush1.bf16.msra.mxu0 %v99
    %118 = vmatprep.subr.bf16.mxu0 0
    %119 = vmatpush1.bf16.msra.mxu0 %v100
    %120 = vmatprep.subr.bf16.mxu0 0
    %121 = vmatpush1.bf16.msra.mxu0 %v101
    %122 = vmatprep.subr.bf16.mxu0 0
    %123 = vmatpush1.bf16.msra.mxu0 %v102
    %124 = vmatprep.subr.bf16.mxu0 0
    %125 = vmatpush1.bf16.msra.mxu0 %v103
    %126 = vmatprep.subr.bf16.mxu0 0
    %127 = vmatpush1.bf16.msra.mxu0 %v104
    %128 = vmatprep.subr.bf16.mxu0 0
    %129 = vmatpush1.bf16.msra.mxu0 %v105
    %130 = vmatprep.subr.bf16.mxu0 0
    %131 = vmatpush1.bf16.msra.mxu0 0
    %132 = vmatprep.subr.bf16.mxu0 0
    %133 = vmatpush1.bf16.msra.mxu0 0
    %134 = vmatprep.subr.bf16.mxu0 0
    %135 = vmatpush1.bf16.msra.mxu0 0
    %136 = vmatprep.subr.bf16.mxu0 0
    %137 = vmatpush1.bf16.msra.mxu0 0
    %138 = vmatprep.subr.bf16.mxu0 0
    %139 = vmatpush1.bf16.msra.mxu0 0
    %140 = vmatprep.subr.bf16.mxu0 0
    %141 = vmatpush1.bf16.msra.mxu0 0
    %142 = vmatprep.subr.bf16.mxu0 0
    %143 = vmatpush1.bf16.msra.mxu0 0
    %144 = vmatprep.subr.bf16.mxu0 0
    %145 = vmatpush1.bf16.msra.mxu0 0
    %146 = vmatprep.mubr.bf16.mxu0 0
    %147 = vmatmul.mubr.bf16.gmra.mrb[0].mxu0 %v42
    %v148 = vpop.f32.mrb[0].mxu0
    %v149 = vadd.f32 %v64, %v148
    %v150 = vpop.f32.mrb[0].mxu0
    %v151 = vpop.f32.mrb[0].mxu0
    %v152 = vpop.f32.mrb[0].mxu0
    %153 = vdwg.mxu0
    %v154 = vtanh.pop %v149
    %155 = vst [vmem:[#allocation7] sm:$0xff] %v154
    // Predicated region
    $region22: #{tpu_custom_call.1} parent=1 // pred_check
      _
    $region23: #{tpu_custom_call.1} parent=1 // pred_check_branch
      %157 = sbr.rel (0) target = $region25
    $region24: #{tpu_custom_call.1} parent=1 // pred_region
      %s159 = ssub.s32 128, 128
      %160 = vsyncadd [#allocation4], %s159
      %s162 = sshll.u32 [#allocation7], 4
      %s163 = int_to_ptr.vmem [resolvable:$true] %s162
      %165 = dma.vmem_to_hbm [thread:$0]  %s163, 128, %s3, [#allocation4]
    $region25: #{tpu_custom_call.1} parent=1 // pred_fallthru
      _
    // Predicated region
    $region26: #{tpu_custom_call.1} parent=1 // pred_check
      _
    $region27: #{tpu_custom_call.1} parent=1 // pred_check_branch
      %167 = sbr.rel (0) target = $region29
    $region28: #{tpu_custom_call.1} parent=1 // pred_region
      %168 = dma.done [#allocation4], 128
    $region29: #{tpu_custom_call.1} parent=1 // pred_fallthru
      _
    %169 = vsyncpa [#allocation3], 1
    %170 = vsyncpa [#allocation6], 1
    %171 = vsyncpa [#allocation4], 1

</llo_original>
